<compile_context>
chip_gen: v5e
topology: v5e:2x2
jax: 0.10.0
libtpu: 0.0.40
codegen_flags: <defaults>
</compile_context>

<pallas_src>
import functools

import jax
import jax.numpy as jnp
import numpy as np
from jax.experimental import pallas as pl
from jax.experimental.pallas import tpu as pltpu


def _sattent_kernel(x_ref, out_ref, w_ref, *, H, W):
    """One batch tile per grid step.

    x_ref  : (bt, C, H*W)  lane-dense view of x
    out_ref: (bt, H*W)     weighted channel sum (dense slab store)
    w_ref  : (bt, C)       per-channel softmax weights
    """
    bt, C, HW = x_ref.shape

    # Upcast keeps the math exact if inputs arrive as bf16 (v5e has no bf16
    # VPU/EUP); a no-op for f32 inputs.  The DMA stays at the input width.
    xf = x_ref[...].astype(jnp.float32)                       # (bt, C, HW)
    # Merge leading dims (minor dim unchanged -> layout-free) for the roll tree.
    x2 = xf.reshape(bt * C, HW)                                # (bt*C, HW)

    # ---- column sums over H -------------------------------------------------
    # col_sum[w] = sum_h x[h*W + w].  With H a power of two, a log2(H)-step
    # rotate-and-add tree (shifts H/2*W .. W, wrapping) leaves col_sum[w]
    # replicated in every lane h*W + w, so max over all lanes == max over w.
    # Rolls run in the XLU slot and co-issue with the VPU adds.
    if H & (H - 1) == 0:
        summed = x2
        shift = (H // 2) * W
        while shift >= W:
            summed = summed + pltpu.roll(summed, shift=shift, axis=1)
            shift //= 2
    else:
        # Fallback for non-power-of-two H: O(H) static lane-slice adds.
        summed = x2[:, 0:W]
        for h in range(1, H):
            summed = summed + x2[:, h * W:(h + 1) * W]
        # Pad semantics: every remaining lane group is unused; max below is
        # taken on the (bt, C, W)-shaped slice via the same reduction path.
        summed = jnp.concatenate([summed] * H, axis=1) if summed.shape[1] != HW else summed

    # Split the leading dim back (minor dim unchanged -> layout-free).
    summed3 = summed.reshape(bt, C, HW)

    # ---- score + softmax (tiny, bt*C-sized math) ----------------------------
    # score = max_w(mean_h x) / sum_w(mean_h x); 1/H cancels, so raw sums.
    # Exact reciprocals: denominators are raw signed sums / tiny softmax sums.
    col_max = jnp.max(summed3, axis=-1, keepdims=True)         # (bt, C, 1)
    total = jnp.sum(xf, axis=-1, keepdims=True)                # (bt, C, 1)
    score = col_max * pl.reciprocal(total, approx=False)       # (bt, C, 1)

    score = score - jnp.max(score, axis=1, keepdims=True)
    e = jnp.exp(score)
    w = e * pl.reciprocal(jnp.sum(e, axis=1, keepdims=True), approx=False)  # (bt, C, 1)

    # ---- apply phase (the only big elementwise work) -------------------------
    # (bt, C, HW) * (bt, C, 1) broadcast, reduce over C (sublane axis) -> dense
    # (bt, HW) slab store.  Kept on the VPU (C is tiny; MXU would be <2% util).
    out = jnp.sum(xf * w, axis=1)                              # (bt, HW)

    out_ref[...] = out.astype(out_ref.dtype)
    w_ref[...] = w[:, :, 0].astype(w_ref.dtype)


def _pick_batch_tile(B, row_bytes, target_bytes=1 << 20):
    """Batch rows per grid step.

    Small problems run as one resident block (no per-step overhead, no exposed
    DMA latency).  Large B is blocked so each input block is ~target_bytes
    (>=512 KiB amortizes the ~0.35 us/step cost and nears the HBM roofline)
    while double-buffered blocks stay far below v7x's 64 MiB VMEM.
    """
    if B * row_bytes <= 4 * target_bytes:
        return B
    best = B
    for bt in range(8, B + 1, 8):
        if B % bt == 0 and bt * row_bytes <= target_bytes:
            best = bt
    return best


def sattent_layer2(x):
    """x: [B, C, H, W] with W == N_freq.  Returns (out [B,1,H,W], weights [B,C])."""
    B, C, H, W = x.shape
    HW = H * W

    # Lane-dense presentation: the kernel's last dim is H*W (a multiple of 128
    # at production shapes) instead of W.  Free row-major view.
    xf = x.reshape(B, C, HW)

    bt = _pick_batch_tile(B, C * HW * x.dtype.itemsize)
    num_steps = B // bt

    kernel = functools.partial(_sattent_kernel, H=H, W=W)

    grid_spec = pltpu.PrefetchScalarGridSpec(
        num_scalar_prefetch=0,
        grid=(num_steps,),
        in_specs=[pl.BlockSpec((bt, C, HW), lambda i: (i, 0, 0))],
        out_specs=(
            pl.BlockSpec((bt, HW), lambda i: (i, 0)),
            pl.BlockSpec((bt, C), lambda i: (i, 0)),
        ),
    )

    # Advisory cost: read x once, write out + weights; the weighted mul/add
    # dominates the (tiny) flop count; exp/reciprocal go to the EUP.
    cost = pl.CostEstimate(
        flops=3 * B * C * HW,
        transcendentals=2 * B * C,
        bytes_accessed=x.dtype.itemsize * (B * C * HW + B * HW + B * C),
    )

    out_flat, weights = pl.pallas_call(
        kernel,
        out_shape=(
            jax.ShapeDtypeStruct((B, HW), x.dtype),
            jax.ShapeDtypeStruct((B, C), x.dtype),
        ),
        grid_spec=grid_spec,
        compiler_params=pltpu.CompilerParams(
            # Megacore sharding only pays off once each core gets >=2 sizable
            # steps; a single-step problem stays on one TensorCore.
            dimension_semantics=("parallel",) if num_steps > 1 else ("arbitrary",),
        ),
        cost_estimate=cost,
    )(xf)

    # Free reshape back to the module's output shape.
    return out_flat.reshape(B, 1, H, W), weights


def sattent_layer2_ref(x):
    """Pure-JAX reference mirroring the torch forward."""
    m = jnp.mean(x, axis=2)                                   # avg_pool -> [B, C, W]
    score = jnp.max(m, axis=-1) / jnp.sum(m, axis=-1)         # [B, C]
    w = jax.nn.softmax(score, axis=-1)
    out = jnp.sum(x * w[:, :, None, None], axis=1, keepdims=True)
    return out, w


if __name__ == "__main__":
    key = jax.random.PRNGKey(0)

    # Small shapes consistent with the module: batch=2, channels(len(input_names))=4,
    # H=16 (time/spatial), W=N_freq=16.
    B, C, H, N_freq = 2, 4, 16, 16
    x = jax.random.uniform(key, (B, C, H, N_freq), dtype=jnp.float32) + 0.1

    # TODO(synk): the module's nn.Linear(1,1)/Sigmoid are declared but unused in
    # forward(), so they are intentionally not implemented in the kernel.

    out, weights = sattent_layer2(x)
    jax.block_until_ready((out, weights))

    out_ref, w_ref = sattent_layer2_ref(x)
    # Both reciprocals are exact now; tolerance only covers f32 summation-order
    # differences between the roll tree and jnp.mean.
    np.testing.assert_allclose(np.asarray(out), np.asarray(out_ref), rtol=1e-4, atol=1e-5)
    np.testing.assert_allclose(np.asarray(weights), np.asarray(w_ref), rtol=1e-4, atol=1e-5)

    assert out.shape == (B, 1, H, N_freq)
    assert weights.shape == (B, C)

    print("KERNEL_OK")
</pallas_src>

<mosaic_0001>
module attributes {stable_mosaic.version = 11 : i64} {
  func.func @_sattent_kernel(%arg0: i32, %arg1: memref<2x4x256xf32, #tpu.memory_space<vmem>>, %arg2: memref<2x256xf32, #tpu.memory_space<vmem>>, %arg3: memref<2x4xf32, #tpu.memory_space<vmem>>) attributes {dimension_semantics = [#tpu.dimension_semantics<arbitrary>], iteration_bounds = array<i64: 1>, scalar_prefetch = 0 : i64, scratch_operands = 0 : i64, tpu.core_type = #tpu.core_type<tc>, window_params = [{transform_indices = @transform_0, window_bounds = array<i64: 2, 4, 256>}, {transform_indices = @transform_1, window_bounds = array<i64: 2, 256>}, {transform_indices = @transform_2, window_bounds = array<i64: 2, 4>}]} {
    %c0 = arith.constant 0 : index
    %c0_0 = arith.constant 0 : index
    %c0_1 = arith.constant 0 : index
    %0 = vector.load %arg1[%c0, %c0_0, %c0_1] : memref<2x4x256xf32, #tpu.memory_space<vmem>>, vector<2x4x256xf32>
    %1 = vector.shape_cast %0 : vector<2x4x256xf32> to vector<8x256xf32>
    %c128_i32 = arith.constant 128 : i32
    %2 = tpu.dynamic_rotate %1 by %c128_i32 dim 1 : vector<8x256xf32>, i32 -> vector<8x256xf32>
    %3 = arith.addf %1, %2 : vector<8x256xf32>
    %c64_i32 = arith.constant 64 : i32
    %4 = tpu.dynamic_rotate %3 by %c64_i32 dim 1 : vector<8x256xf32>, i32 -> vector<8x256xf32>
    %5 = arith.addf %3, %4 : vector<8x256xf32>
    %c32_i32 = arith.constant 32 : i32
    %6 = tpu.dynamic_rotate %5 by %c32_i32 dim 1 : vector<8x256xf32>, i32 -> vector<8x256xf32>
    %7 = arith.addf %5, %6 : vector<8x256xf32>
    %c16_i32 = arith.constant 16 : i32
    %8 = tpu.dynamic_rotate %7 by %c16_i32 dim 1 : vector<8x256xf32>, i32 -> vector<8x256xf32>
    %9 = arith.addf %7, %8 : vector<8x256xf32>
    %10 = vector.shape_cast %9 : vector<8x256xf32> to vector<2x4x256xf32>
    %cst = arith.constant dense<0xFF800000> : vector<2x4xf32>
    %11 = vector.multi_reduction <maximumf>, %10, %cst [2] : vector<2x4x256xf32> to vector<2x4xf32>
    %12 = vector.shape_cast %11 : vector<2x4xf32> to vector<2x4x1xf32>
    %cst_2 = arith.constant dense<0.000000e+00> : vector<2x4xf32>
    %13 = vector.multi_reduction <add>, %0, %cst_2 [2] : vector<2x4x256xf32> to vector<2x4xf32>
    %14 = vector.shape_cast %13 : vector<2x4xf32> to vector<2x4x1xf32>
    %15 = tpu.reciprocal %14 : vector<2x4x1xf32> -> vector<2x4x1xf32>
    %16 = arith.mulf %12, %15 : vector<2x4x1xf32>
    %cst_3 = arith.constant dense<0xFF800000> : vector<2x1xf32>
    %17 = vector.multi_reduction <maximumf>, %16, %cst_3 [1] : vector<2x4x1xf32> to vector<2x1xf32>
    %18 = vector.shape_cast %17 : vector<2x1xf32> to vector<2x1x1xf32>
    %19 = vector.broadcast %18 : vector<2x1x1xf32> to vector<2x4x1xf32>
    %20 = arith.subf %16, %19 : vector<2x4x1xf32>
    %21 = math.exp %20 : vector<2x4x1xf32>
    %cst_4 = arith.constant dense<0.000000e+00> : vector<2x1xf32>
    %22 = vector.multi_reduction <add>, %21, %cst_4 [1] : vector<2x4x1xf32> to vector<2x1xf32>
    %23 = vector.shape_cast %22 : vector<2x1xf32> to vector<2x1x1xf32>
    %24 = tpu.reciprocal %23 : vector<2x1x1xf32> -> vector<2x1x1xf32>
    %25 = vector.broadcast %24 : vector<2x1x1xf32> to vector<2x4x1xf32>
    %26 = arith.mulf %21, %25 : vector<2x4x1xf32>
    %27 = vector.broadcast %26 : vector<2x4x1xf32> to vector<2x4x256xf32>
    %28 = arith.mulf %0, %27 : vector<2x4x256xf32>
    %cst_5 = arith.constant dense<0.000000e+00> : vector<2x256xf32>
    %29 = vector.multi_reduction <add>, %28, %cst_5 [1] : vector<2x4x256xf32> to vector<2x256xf32>
    %c0_6 = arith.constant 0 : index
    %c0_7 = arith.constant 0 : index
    %30 = vector.load %arg2[%c0_6, %c0_7] : memref<2x256xf32, #tpu.memory_space<vmem>>, vector<2x256xf32>
    tpu.vector_store %arg2[%c0_6, %c0_7], %29 {strides = array<i32>} : memref<2x256xf32, #tpu.memory_space<vmem>>, vector<2x256xf32>,
    %31 = vector.shape_cast %26 : vector<2x4x1xf32> to vector<2x4xf32>
    %c0_8 = arith.constant 0 : index
    %c0_9 = arith.constant 0 : index
    %32 = vector.load %arg3[%c0_8, %c0_9] : memref<2x4xf32, #tpu.memory_space<vmem>>, vector<2x4xf32>
    tpu.vector_store %arg3[%c0_8, %c0_9], %31 {strides = array<i32>} : memref<2x4xf32, #tpu.memory_space<vmem>>, vector<2x4xf32>,
    return
  }
  func.func @transform_0(%arg0: i32) -> (i32, i32, i32) {
    %c0_i32 = arith.constant 0 : i32
    %c0_i32_0 = arith.constant 0 : i32
    %c0_i32_1 = arith.constant 0 : i32
    return %arg0, %c0_i32, %c0_i32_0 : i32, i32, i32
  }
  func.func @transform_1(%arg0: i32) -> (i32, i32) {
    %c0_i32 = arith.constant 0 : i32
    %c0_i32_0 = arith.constant 0 : i32
    return %arg0, %c0_i32 : i32, i32
  }
  func.func @transform_2(%arg0: i32) -> (i32, i32) {
    %c0_i32 = arith.constant 0 : i32
    %c0_i32_0 = arith.constant 0 : i32
    return %arg0, %c0_i32 : i32, i32
  }
}

</mosaic_0001>

<llo_original>
// kernel: tpu_custom_call.1
$region0: #{tpu_custom_call.1}
  #allocation0 [shape = 'u32[]', space=smem, size = 0x4, offset = 0x4, fixed_abs, tag = 'smem constant byte address 0x4 - core index']
  #allocation1 [shape = 'u32[72,128]{1,0:T(1,128)}', space=vmem, size = 0x9000, scoped, tag = 'internal scratch']
  %s0 = inlined_call_operand.hbm [shape: f32[2,4,256], index: 0, kind: input, shape index: {}]
  %s1 = inlined_call_operand.hbm [shape: f32[2,256], index: 1, kind: output, shape index: {0}]
  %s2 = inlined_call_operand.hbm [shape: f32[2,4], index: 2, kind: output, shape index: {1}]
  %3 = xla_tuple %s1, %s2
  %s4 = sld [smem:[#allocation0]]
  $region26: #{tpu_custom_call.1} parent=0
    _
  %s6 = ssub.s32 1, %s4
  %s7 = scalar_select 0, %s6, %s4
  $region1: #{tpu_custom_call.1} parent=0
    #allocation2 [shape = 'u8[8192]{0}', space=vmem, size = 0x2000, scoped, tag = 'input window, operand 0, single buffered']
    #allocation3 [shape = 's32[1]{0}', space=sflag, size = 0x4, scoped, tag = 'scoped memory for tpu_custom_call.1']
    #allocation4 [shape = 's32[1]{0}', space=sflag, size = 0x4, scoped, tag = 'scoped memory for tpu_custom_call.1']
    #allocation5 [shape = 'u8[2048]{0}', space=vmem, size = 0x800, scoped, tag = 'output window, operand 0, single buffered']
    #allocation6 [shape = 'u8[1024]{0}', space=vmem, size = 0x400, scoped, tag = 'output window, operand 1, single buffered']
    #allocation7 [shape = 's32[1]{0}', space=sflag, size = 0x4, scoped, tag = 'scoped memory for tpu_custom_call.1']
    %8 = vsyncpa [#allocation3], 0
    %9 = vsyncpa [#allocation4], 0
    %10 = vsyncpa [#allocation7], 0
    // Predicated region
    $region2: #{tpu_custom_call.1} parent=1 // pred_check
      _
    $region3: #{tpu_custom_call.1} parent=1 // pred_check_branch
      %12 = sbr.rel (0) target = $region5
    $region4: #{tpu_custom_call.1} parent=1 // pred_region
      %14 = vsyncadd [#allocation3], 0
      %s15 = sshll.u32 %s0, 4
      %s16 = int_to_ptr.hbm [resolvable:$true] %s15
      %s17 = sshll.u32 [#allocation2], 4
      %s18 = int_to_ptr.vmem [resolvable:$true] %s17
      %23 = dma.hbm_to_vmem [thread:$0]  %s16, 256, %s18, [#allocation3], 128, 128, 8
    $region5: #{tpu_custom_call.1} parent=1 // pred_fallthru
      _
    // Predicated region
    $region6: #{tpu_custom_call.1} parent=1 // pred_check
      _
    $region7: #{tpu_custom_call.1} parent=1 // pred_check_branch
      %25 = sbr.rel (0) target = $region9
    $region8: #{tpu_custom_call.1} parent=1 // pred_region
      %27 = dma.done [#allocation3], 256
    $region9: #{tpu_custom_call.1} parent=1 // pred_fallthru
      _
    %v28 = vld [vmem:[#allocation2] sm:$0xff]
    %v29 = vld [vmem:[#allocation2 + $0x8] sm:$0xff]
    %32 = vst [vmem:[#allocation1] ss:$2 sm:$0xff] %v28
    %s33 = scalar_lea.vmem [#allocation1], 1
    %34 = vst [vmem:[%s33] ss:$2 sm:$0xff] %v29
    %v35 = vld.sshfl [vmem:[#allocation1] sm:$0xff pattern:$0x75316420]
    %v36 = vld.sshfl [vmem:[#allocation1 + $0x8] sm:$0xff pattern:$0x75316420]
    %v37 = vrot.slane %v35, 4
    %vm38 = vcmask 1043456
    %v39 = vsel %vm38, %v36, %v37
    %v40 = vsel %vm38, %v37, %v36
    %v41 = vrot.slane %v40, 4
    %v44 = vadd.f32 %v28, %v39
    %v45 = vadd.f32 %v29, %v41
    %48 = vst [vmem:[#allocation1] ss:$2 sm:$0xff] %v44
    %s49 = scalar_lea.vmem [#allocation1], 1
    %50 = vst [vmem:[%s49] ss:$2 sm:$0xff] %v45
    %v51 = vld.sshfl [vmem:[#allocation1] sm:$0xff pattern:$0x75316420]
    %v52 = vld.sshfl [vmem:[#allocation1 + $0x8] sm:$0xff pattern:$0x75316420]
    %55 = vrot.lane.b32.xlu0 %v51, 64
    %v56 = vpop.permute.xlu0 %55
    %57 = vrot.lane.b32.xlu0 %v52, 64
    %v58 = vpop.permute.xlu0 %57
    %v59 = vlaneseq
    %v60 = vand.u32 %v59, 127
    %vm61 = vcmp.lt.s32.totalorder %v60, 64
    %v62 = vsel %vm61, %v56, %v58
    %v63 = vsel %vm61, %v58, %v56
    %v66 = vrot.slane %v62, 4
    %v67 = vsel %vm38, %v63, %v66
    %v68 = vsel %vm38, %v66, %v63
    %v69 = vrot.slane %v68, 4
    %v72 = vadd.f32 %v44, %v67
    %v73 = vadd.f32 %v45, %v69
    %76 = vst [vmem:[#allocation1] ss:$2 sm:$0xff] %v72
    %s77 = scalar_lea.vmem [#allocation1], 1
    %78 = vst [vmem:[%s77] ss:$2 sm:$0xff] %v73
    %v79 = vld.sshfl [vmem:[#allocation1] sm:$0xff pattern:$0x75316420]
    %v80 = vld.sshfl [vmem:[#allocation1 + $0x8] sm:$0xff pattern:$0x75316420]
    %83 = vrot.lane.b32.xlu0 %v79, 32
    %v84 = vpop.permute.xlu0 %83
    %85 = vrot.lane.b32.xlu0 %v80, 32
    %v86 = vpop.permute.xlu0 %85
    %vm87 = vcmp.lt.s32.totalorder %v60, 32
    %v88 = vsel %vm87, %v84, %v86
    %v89 = vsel %vm87, %v86, %v84
    %v92 = vrot.slane %v88, 4
    %v93 = vsel %vm38, %v89, %v92
    %v94 = vsel %vm38, %v92, %v89
    %v95 = vrot.slane %v94, 4
    %v98 = vadd.f32 %v72, %v93
    %v99 = vadd.f32 %v73, %v95
    %102 = vst [vmem:[#allocation1] ss:$2 sm:$0xff] %v98
    %s103 = scalar_lea.vmem [#allocation1], 1
    %104 = vst [vmem:[%s103] ss:$2 sm:$0xff] %v99
    %v105 = vld.sshfl [vmem:[#allocation1] sm:$0xff pattern:$0x75316420]
    %v106 = vld.sshfl [vmem:[#allocation1 + $0x8] sm:$0xff pattern:$0x75316420]
    %109 = vrot.lane.b32.xlu0 %v105, 16
    %v110 = vpop.permute.xlu0 %109
    %111 = vrot.lane.b32.xlu0 %v106, 16
    %v112 = vpop.permute.xlu0 %111
    %vm113 = vcmp.lt.s32.totalorder %v60, 16
    %v114 = vsel %vm113, %v110, %v112
    %v115 = vsel %vm113, %v112, %v110
    %v118 = vrot.slane %v114, 4
    %v119 = vsel %vm38, %v115, %v118
    %v120 = vsel %vm38, %v118, %v115
    %v121 = vrot.slane %v120, 4
    %v124 = vadd.f32 %v98, %v119
    %v125 = vadd.f32 %v99, %v121
    %128 = vst [vmem:[#allocation1] ss:$2 sm:$0xff] %v124
    %v129 = vld.sshfl [vmem:[#allocation1] sm:$0xff pattern:$0x75316420]
    %v130 = vld.sshfl [vmem:[#allocation1 + $0x8] sm:$0xff pattern:$0x75316420]
    %s131 = scalar_lea.vmem [#allocation1], 16
    %132 = vst [vmem:[%s131] ss:$2 sm:$0xff] %v125
    %v133 = vld.sshfl [vmem:[#allocation1 + $0x10] sm:$0xff pattern:$0x75316420]
    %v134 = vld.sshfl [vmem:[#allocation1 + $0x18] sm:$0xff pattern:$0x75316420]
    %v139 = vsel %vm38, %v129, -inf
    %v140 = vsel %vm38, %v130, -inf
    %v141 = vmax.f32 %v139, %v140
    %142 = vmax.xlane.f32.xlu0 %v141
    %v143 = vpop.xlane.xlu0 %142
    %v144 = vsel %vm38, %v133, -inf
    %v145 = vsel %vm38, %v134, -inf
    %v146 = vmax.f32 %v144, %v145
    %147 = vmax.xlane.f32.xlu0 %v146
    %v148 = vpop.xlane.xlu0 %147
    %149 = vst [vmem:[#allocation1] ss:$2 sm:$0xff] %v28
    %v150 = vld.sshfl [vmem:[#allocation1] sm:$0xff pattern:$0x75316420]
    %v151 = vld.sshfl [vmem:[#allocation1 + $0x8] sm:$0xff pattern:$0x75316420]
    %s152 = scalar_lea.vmem [#allocation1], 16
    %153 = vst [vmem:[%s152] ss:$2 sm:$0xff] %v29
    %v154 = vld.sshfl [vmem:[#allocation1 + $0x10] sm:$0xff pattern:$0x75316420]
    %v155 = vld.sshfl [vmem:[#allocation1 + $0x18] sm:$0xff pattern:$0x75316420]
    %v160 = vsel %vm38, %v150, 0.0
    %v161 = vsel %vm38, %v151, 0.0
    %v162 = vadd.f32 %v160, %v161
    %163 = vadd.xlane.f32.xlu0 %v162
    %v164 = vpop.xlane.xlu0 %163
    %v165 = vsel %vm38, %v154, 0.0
    %v166 = vsel %vm38, %v155, 0.0
    %v167 = vadd.f32 %v165, %v166
    %168 = vadd.xlane.f32.xlu0 %v167
    %v169 = vpop.xlane.xlu0 %168
    %v170 = vrcp.pop %v164
    %v171 = vmul.f32 %v164, %v170
    %v172 = vsub.f32 1.0, %v171
    %v173 = vmul.f32 %v170, %v172
    %v174 = vadd.f32 %v170, %v173
    %vm175 = vweird.f32 %v164
    %vm176 = vweird.f32 %v170
    %vm177 = vmor %vm175, %vm176
    %v178 = vsel %vm177, %v170, %v174
    %v179 = vand.u32 2147483647, %v164
    %vm180 = vcmp.eq.f32.partialorder %v179, 8.507059e+37
    %v181 = vand.u32 %v164, 2147483648
    %v182 = vor.u32 1.1754944e-38, %v181
    %v183 = vsel %vm180, %v182, %v178
    %v184 = vrcp.pop %v169
    %v185 = vmul.f32 %v169, %v184
    %v186 = vsub.f32 1.0, %v185
    %v187 = vmul.f32 %v184, %v186
    %v188 = vadd.f32 %v184, %v187
    %vm189 = vweird.f32 %v169
    %vm190 = vweird.f32 %v184
    %vm191 = vmor %vm189, %vm190
    %v192 = vsel %vm191, %v184, %v188
    %v193 = vand.u32 2147483647, %v169
    %vm194 = vcmp.eq.f32.partialorder %v193, 8.507059e+37
    %v195 = vand.u32 %v169, 2147483648
    %v196 = vor.u32 1.1754944e-38, %v195
    %v197 = vsel %vm194, %v196, %v192
    %v198 = vmul.f32 %v143, %v183
    %v199 = vmul.f32 %v148, %v197
    %v200 = vsel %vm38, %v198, -inf
    %v201 = vrot.slane %v200, 4
    %v202 = vmax.f32 %v200, %v201
    %v203 = vrot.slane %v202, 2
    %v204 = vmax.f32 %v202, %v203
    %v205 = vrot.slane %v204, 1
    %v206 = vmax.f32 %v204, %v205
    %v207 = vsel %vm38, %v199, -inf
    %v208 = vrot.slane %v207, 4
    %v209 = vmax.f32 %v207, %v208
    %v210 = vrot.slane %v209, 2
    %v211 = vmax.f32 %v209, %v210
    %v212 = vrot.slane %v211, 1
    %v213 = vmax.f32 %v211, %v212
    %v214 = vsub.f32 %v198, %v206
    %v215 = vsub.f32 %v199, %v213
    %v216 = vmul.f32 %v214, 1.442695
    %v217 = vpow.pop %v216
    %v218 = vmul.f32 %v215, 1.442695
    %v219 = vpow.pop %v218
    %v220 = vsel %vm38, %v217, 0.0
    %v221 = vrot.slane %v220, 4
    %v222 = vadd.f32 %v220, %v221
    %v223 = vrot.slane %v222, 2
    %v224 = vadd.f32 %v222, %v223
    %v225 = vrot.slane %v224, 1
    %v226 = vadd.f32 %v224, %v225
    %v227 = vsel %vm38, %v219, 0.0
    %v228 = vrot.slane %v227, 4
    %v229 = vadd.f32 %v227, %v228
    %v230 = vrot.slane %v229, 2
    %v231 = vadd.f32 %v229, %v230
    %v232 = vrot.slane %v231, 1
    %v233 = vadd.f32 %v231, %v232
    %v234 = vrcp.pop %v226
    %v235 = vmul.f32 %v226, %v234
    %v236 = vsub.f32 1.0, %v235
    %v237 = vmul.f32 %v234, %v236
    %v238 = vadd.f32 %v234, %v237
    %vm239 = vweird.f32 %v226
    %vm240 = vweird.f32 %v234
    %vm241 = vmor %vm239, %vm240
    %v242 = vsel %vm241, %v234, %v238
    %v243 = vand.u32 2147483647, %v226
    %vm244 = vcmp.eq.f32.partialorder %v243, 8.507059e+37
    %v245 = vand.u32 %v226, 2147483648
    %v246 = vor.u32 1.1754944e-38, %v245
    %v247 = vsel %vm244, %v246, %v242
    %v248 = vrcp.pop %v233
    %v249 = vmul.f32 %v233, %v248
    %v250 = vsub.f32 1.0, %v249
    %v251 = vmul.f32 %v248, %v250
    %v252 = vadd.f32 %v248, %v251
    %vm253 = vweird.f32 %v233
    %vm254 = vweird.f32 %v248
    %vm255 = vmor %vm253, %vm254
    %v256 = vsel %vm255, %v248, %v252
    %v257 = vand.u32 2147483647, %v233
    %vm258 = vcmp.eq.f32.partialorder %v257, 8.507059e+37
    %v259 = vand.u32 %v233, 2147483648
    %v260 = vor.u32 1.1754944e-38, %v259
    %v261 = vsel %vm258, %v260, %v256
    %v262 = vmul.f32 %v217, %v247
    %v263 = vmul.f32 %v219, %v261
    %v267 = vunpack.c.l.s4 839922192
    %v268 = vunpack.c.0.s8 %v267
    %v269 = vperm.slane %v262, %v268
    %v271 = vunpack.c.l.s4 839922192
    %v272 = vunpack.c.0.s8 %v271
    %v273 = vperm.slane %v263, %v272
    %v276 = vmul.f32 %v28, %v269
    %v277 = vmul.f32 %v29, %v273
    %280 = vst [vmem:[#allocation1] ss:$2 sm:$0xff] %v276
    %v281 = vld.sshfl [vmem:[#allocation1] sm:$0xff pattern:$0x75316420]
    %v282 = vld.sshfl [vmem:[#allocation1 + $0x8] sm:$0xff pattern:$0x75316420]
    %s283 = scalar_lea.vmem [#allocation1], 16
    %284 = vst [vmem:[%s283] ss:$2 sm:$0xff] %v277
    %v285 = vld.sshfl [vmem:[#allocation1 + $0x10] sm:$0xff pattern:$0x75316420]
    %v286 = vld.sshfl [vmem:[#allocation1 + $0x18] sm:$0xff pattern:$0x75316420]
    %v291 = vsel %vm38, %v281, 0.0
    %v292 = vrot.slane %v291, 4
    %v293 = vadd.f32 %v291, %v292
    %v294 = vrot.slane %v293, 2
    %v295 = vadd.f32 %v293, %v294
    %v296 = vrot.slane %v295, 1
    %v297 = vadd.f32 %v295, %v296
    %v298 = vsel %vm38, %v282, 0.0
    %v299 = vrot.slane %v298, 4
    %v300 = vadd.f32 %v298, %v299
    %v301 = vrot.slane %v300, 2
    %v302 = vadd.f32 %v300, %v301
    %v303 = vrot.slane %v302, 1
    %v304 = vadd.f32 %v302, %v303
    %v305 = vsel %vm38, %v285, 0.0
    %v306 = vrot.slane %v305, 4
    %v307 = vadd.f32 %v305, %v306
    %v308 = vrot.slane %v307, 2
    %v309 = vadd.f32 %v307, %v308
    %v310 = vrot.slane %v309, 1
    %v311 = vadd.f32 %v309, %v310
    %v312 = vsel %vm38, %v286, 0.0
    %v313 = vrot.slane %v312, 4
    %v314 = vadd.f32 %v312, %v313
    %v315 = vrot.slane %v314, 2
    %v316 = vadd.f32 %v314, %v315
    %v317 = vrot.slane %v316, 1
    %v318 = vadd.f32 %v316, %v317
    %v323 = vrot.slane %v304, 6
    %v324 = vrot.slane %v318, 6
    %vm325 = vcmask 1041408
    %v326 = vsel %vm325, %v297, %v323
    %v327 = vsel %vm325, %v311, %v324
    %vm328 = vcmask 1044484
    %v329 = vsel %vm328, %v326, %v326
    %vm330 = vcmask 1046534
    %v331 = vsel %vm330, %v326, %v329
    %v332 = vrot.slane %v327, 7
    %vm333 = vcmask 1041409
    %v334 = vsel %vm333, %v332, %v331
    %vm335 = vcmask 1043459
    %v336 = vsel %vm335, %v332, %v334
    %vm337 = vcmask 1045509
    %v338 = vsel %vm337, %v332, %v336
    %vm339 = vcmask 1047559
    %v340 = vsel %vm339, %v332, %v338
    %342 = vst [vmem:[#allocation5] sm:$0xf] %v340
    %v343 = vperm.slane %v262, %v60
    %v344 = vperm.slane %v263, %v60
    %v345 = vsel %vm333, %v344, %v343
    %vm347 = vcmask 25600
    %348 = vst.msk [vmem:[#allocation6] sm:$0x3] %vm347, %v345
    // Predicated region
    $region10: #{tpu_custom_call.1} parent=1 // pred_check
      _
    $region11: #{tpu_custom_call.1} parent=1 // pred_check_branch
      %350 = sbr.rel (0) target = $region13
    $region12: #{tpu_custom_call.1} parent=1 // pred_region
      %352 = vsyncadd [#allocation4], 0
      %s354 = sshll.u32 [#allocation5], 4
      %s355 = int_to_ptr.vmem [resolvable:$true] %s354
      %s356 = sshll.u32 %s1, 4
      %s357 = int_to_ptr.hbm [resolvable:$true] %s356
      %359 = dma.vmem_to_hbm [thread:$0]  %s355, 64, %s357, [#allocation4]
    $region13: #{tpu_custom_call.1} parent=1 // pred_fallthru
      _
    // Predicated region
    $region14: #{tpu_custom_call.1} parent=1 // pred_check
      _
    $region15: #{tpu_custom_call.1} parent=1 // pred_check_branch
      %361 = sbr.rel (0) target = $region17
    $region16: #{tpu_custom_call.1} parent=1 // pred_region
      %363 = vsyncadd [#allocation7], 0
      %s365 = sshll.u32 [#allocation6], 4
      %s366 = int_to_ptr.vmem [resolvable:$true] %s365
      %s367 = sshll.u32 %s2, 4
      %s368 = int_to_ptr.hbm [resolvable:$true] %s367
      %370 = dma.vmem_to_hbm [thread:$0]  %s366, 32, %s368, [#allocation7]
    $region17: #{tpu_custom_call.1} parent=1 // pred_fallthru
      _
    // Predicated region
    $region18: #{tpu_custom_call.1} parent=1 // pred_check
      _
    $region19: #{tpu_custom_call.1} parent=1 // pred_check_branch
      %372 = sbr.rel (0) target = $region21
    $region20: #{tpu_custom_call.1} parent=1 // pred_region
      %374 = dma.done [#allocation4], 64
    $region21: #{tpu_custom_call.1} parent=1 // pred_fallthru
      _
    // Predicated region
    $region22: #{tpu_custom_call.1} parent=1 // pred_check
      _
    $region23: #{tpu_custom_call.1} parent=1 // pred_check_branch
      %376 = sbr.rel (0) target = $region25
    $region24: #{tpu_custom_call.1} parent=1 // pred_region
      %378 = dma.done [#allocation7], 32
    $region25: #{tpu_custom_call.1} parent=1 // pred_fallthru
      _
    %379 = vsyncpa [#allocation3], 1
    %380 = vsyncpa [#allocation4], 1
    %381 = vsyncpa [#allocation7], 1

</llo_original>
